<compile_context>
chip_gen: v5e
topology: v5e:2x2
jax: 0.10.0
libtpu: 0.0.40
codegen_flags: <defaults>
</compile_context>

<pallas_src>
import numpy as np
import jax
import jax.numpy as jnp
from jax.experimental import pallas as pl
from jax.experimental.pallas import tpu as pltpu


def _round_up(x: int, m: int) -> int:
    return ((x + m - 1) // m) * m


def _cdiv(a: int, b: int) -> int:
    return -(-a // b)


def _vmem_limit_bytes() -> int:
    """~80% of this generation's physical VMEM; leaves headroom for compiler scratch."""
    try:
        cap = int(pltpu.get_tpu_info().vmem_capacity_bytes)
        return max(32 * 1024 * 1024, min(int(cap * 0.8), cap - (8 << 20)))
    except Exception:
        return 48 * 1024 * 1024   # safe on v5e / v6e / v7x


def _choose_hidden_tile(H: int, max_th: int):
    """Pick hidden tile TH and padded hidden dim Hp (multiple of TH)."""
    if H <= max_th:
        return H, H                       # whole hidden dim in one (full-dim) tile
    Hp = _round_up(H, 128)
    start = max(128, max_th - (max_th % 128))
    for th in range(start, 0, -128):      # largest 128-multiple <= max_th dividing Hp
        if Hp % th == 0:
            return th, Hp
    return 128, Hp


# ----------------------------------------------------------------------------
# Fused FFN kernel. Grid = (M tiles, H tiles); H is the reduction axis (last).
# ----------------------------------------------------------------------------
def ffn_kernel(x_ref, w1_ref, b1_ref, w2_ref, b2_ref, o_ref, acc_ref):
    # x_ref : (TM, D)   input rows (fetched once per M tile; constant over h)
    # w1_ref: (D, TH)   linear_1 weight^T tile (streams over h)
    # b1_ref: (1, TH)   linear_1 bias tile (f32)
    # w2_ref: (TH, D)   linear_2 weight^T tile
    # b2_ref: (1, D)    linear_2 bias (f32)
    # o_ref : (TM, D)   output rows (written at the last h step)
    # acc_ref:(TM, D)   f32 accumulator (VMEM scratch)
    h_idx = pl.program_id(1)

    @pl.when(h_idx == 0)
    def _():
        acc_ref[...] = jnp.zeros_like(acc_ref)

    x = x_ref[...].astype(w1_ref.dtype)                                 # MXU input dtype
    h = jnp.dot(x, w1_ref[...], preferred_element_type=jnp.float32)     # (TM, TH) f32
    h = jnp.maximum(h + b1_ref[...], 0.0)                               # bias + ReLU (f32)
    h = h.astype(w2_ref.dtype)                                          # MXU input dtype
    acc_ref[...] += jnp.dot(h, w2_ref[...], preferred_element_type=jnp.float32)

    @pl.when(h_idx == pl.num_programs(1) - 1)
    def _():
        o_ref[...] = (acc_ref[...] + b2_ref[...]).astype(o_ref.dtype)


# ----------------------------------------------------------------------------
# One-time parameter preparation (hoisted out of the per-call path).
# ----------------------------------------------------------------------------
def prepare_ffn_params(w1, b1, w2, b2, *, compute_dtype=jnp.bfloat16, max_hidden_tile=1024):
    """Do this ONCE at parameter init, not per forward call.

    w1: (H, D) = nn.Linear(in_features=D, out_features=H).weight
    b1: (H,)
    w2: (D, H) = nn.Linear(in_features=H, out_features=D).weight
    b2: (D,)
    compute_dtype: MXU input dtype for x / weights (default bf16; None = keep f32).
    """
    H, D = w1.shape
    assert w2.shape == (D, H), w2.shape
    assert b1.shape == (H,) and b2.shape == (D,)

    w_dtype = w1.dtype if compute_dtype is None else compute_dtype
    TH, Hp = _choose_hidden_tile(H, max_hidden_tile)

    w1t = jnp.transpose(w1).astype(w_dtype)        # (D, H)
    w2t = jnp.transpose(w2).astype(w_dtype)        # (H, D)
    b1r = b1.astype(jnp.float32).reshape(1, H)     # f32 epilogue adds
    b2r = b2.astype(jnp.float32).reshape(1, D)
    if Hp != H:  # zero-pad hidden dim once: padded columns contribute exactly 0
        w1t = jnp.pad(w1t, ((0, 0), (0, Hp - H)))
        w2t = jnp.pad(w2t, ((0, Hp - H), (0, 0)))
        b1r = jnp.pad(b1r, ((0, 0), (0, Hp - H)))

    # TODO(synk): optional fp8 weight storage (with per-channel scales in the f32
    # epilogue) for v7x's fp8 MXU / 64 MiB VMEM.
    return {"w1t": w1t, "b1": b1r, "w2t": w2t, "b2": b2r,
            "th": TH, "in_dim": D, "hidden_dim": H}


# ----------------------------------------------------------------------------
# Forward: fold leading dims -> M, ragged-tile M, H-tiled reduction.
# ----------------------------------------------------------------------------
def position_wise_feed_forward(x, params, *, tm=256):
    """x: (..., D) activations; params from prepare_ffn_params(). Returns (..., D)."""
    D = params["in_dim"]
    assert x.shape[-1] == D, (x.shape, D)
    w1t, b1r, w2t, b2r = params["w1t"], params["b1"], params["w2t"], params["b2"]
    TH = params["th"]
    Hp = w1t.shape[1]
    n_h = Hp // TH

    out_dtype = x.dtype
    lead_shape = x.shape[:-1]
    M = 1
    for s in lead_shape:
        M *= int(s)
    x2 = x.reshape(M, D)                          # metadata-only reshape

    # M tile: multiple of 8 sublanes, <= M; ragged last tile handled by cdiv grid
    # (masked partial writes) -- no host-side pad/slice of the activations.
    tm = max(8, (tm // 8) * 8)
    if M <= 8:
        TM, n_m = M, 1
    else:
        TM = min(tm, (M // 8) * 8)
        n_m = _cdiv(M, TM)
        if n_m == 1:
            # ensure >= 2 M tiles so v7x's two TensorCores both get work
            TM = _round_up(_cdiv(M, 2), 8)
            n_m = _cdiv(M, TM)

    weight_passes = 1 if n_h == 1 else n_m
    cost = pl.CostEstimate(
        flops=4 * M * D * Hp,
        transcendentals=0,
        bytes_accessed=(x2.size * x2.dtype.itemsize
                        + M * D * jnp.dtype(out_dtype).itemsize
                        + weight_passes * (w1t.size + w2t.size) * w1t.dtype.itemsize
                        + b1r.size * 4 + b2r.size * 4),
    )

    weights_const = (n_h == 1)

    def build(single_buffer_const_blocks: bool):
        def spec(shape, index_map, constant=False):
            if constant and single_buffer_const_blocks:
                # constant-index blocks don't need double buffering
                return pl.BlockSpec(shape, index_map, pipeline_mode=pl.Buffered(1))
            return pl.BlockSpec(shape, index_map)

        return pl.pallas_call(
            ffn_kernel,
            out_shape=jax.ShapeDtypeStruct((M, D), out_dtype),
            grid=(n_m, n_h),
            in_specs=[
                spec((TM, D), lambda i, h: (i, 0)),                           # x rows
                spec((D, TH), lambda i, h: (0, h), constant=weights_const),   # W1^T
                spec((1, TH), lambda i, h: (0, h), constant=weights_const),   # b1
                spec((TH, D), lambda i, h: (h, 0), constant=weights_const),   # W2^T
                spec((1, D), lambda i, h: (0, 0), constant=True),             # b2
            ],
            out_specs=pl.BlockSpec((TM, D), lambda i, h: (i, 0)),
            scratch_shapes=[pltpu.VMEM((TM, D), jnp.float32)],
            compiler_params=pltpu.CompilerParams(
                dimension_semantics=("parallel", "arbitrary"),
                vmem_limit_bytes=_vmem_limit_bytes(),
            ),
            cost_estimate=cost,
        )

    try:
        out2 = build(True)(x2, w1t, b1r, w2t, b2r)
    except Exception:
        # pipeline_mode=pl.Buffered(1) not supported on this jax build/backend:
        # fall back to default double buffering (correctness unaffected).
        out2 = build(False)(x2, w1t, b1r, w2t, b2r)

    # TODO(synk): for tiny feature widths (D < 128) a lane-dense (128-padded)
    # output layout would avoid masked vst.msk stores; irrelevant for real widths.
    return out2.reshape(lead_shape + (D,))


# ----------------------------------------------------------------------------
# Pure-JAX reference (matches the PyTorch module exactly).
# ----------------------------------------------------------------------------
def _reference(x, w1, b1, w2, b2):
    h = jnp.maximum(jnp.einsum("...i,hi->...h", x, w1) + b1, 0.0)
    return jnp.einsum("...h,oh->...o", h, w2) + b2


if __name__ == "__main__":
    # ---- test 1: module-default small shapes ---------------------------------
    B, S, in_dim, hidden_dim = 2, 8, 16, 32
    key = jax.random.PRNGKey(0)
    kx, kw1, kb1, kw2, kb2 = jax.random.split(key, 5)

    x = jax.random.normal(kx, (B, S, in_dim), dtype=jnp.float32)
    bound1 = 1.0 / np.sqrt(in_dim)
    w1 = jax.random.uniform(kw1, (hidden_dim, in_dim), minval=-bound1, maxval=bound1,
                            dtype=jnp.float32)
    b1 = jax.random.uniform(kb1, (hidden_dim,), minval=-bound1, maxval=bound1,
                            dtype=jnp.float32)
    bound2 = 1.0 / np.sqrt(hidden_dim)
    w2 = jax.random.uniform(kw2, (in_dim, hidden_dim), minval=-bound2, maxval=bound2,
                            dtype=jnp.float32)
    b2 = jax.random.uniform(kb2, (in_dim,), minval=-bound2, maxval=bound2,
                            dtype=jnp.float32)

    ref = _reference(x, w1, b1, w2, b2)

    # f32 debug path (bit-faithful to the PyTorch module).
    params_f32 = prepare_ffn_params(w1, b1, w2, b2, compute_dtype=None)
    out_f32 = jax.block_until_ready(position_wise_feed_forward(x, params_f32))
    np.testing.assert_allclose(np.asarray(out_f32), np.asarray(ref), rtol=1e-5, atol=1e-5)

    # default bf16 MXU path (f32 accumulation / f32 bias epilogue).
    params_bf16 = prepare_ffn_params(w1, b1, w2, b2)
    out_bf16 = jax.block_until_ready(position_wise_feed_forward(x, params_bf16))
    np.testing.assert_allclose(np.asarray(out_bf16), np.asarray(ref), rtol=5e-2, atol=5e-2)

    # ---- test 2: ragged M tile + H-tiled reduction axis (still small) --------
    B2, S2, in2, hid2 = 2, 70, 24, 160            # M=140 (ragged), H padded 160->256
    kx2, kw1b, kb1b, kw2b, kb2b = jax.random.split(jax.random.PRNGKey(1), 5)
    x_b = jax.random.normal(kx2, (B2, S2, in2), dtype=jnp.float32)
    w1_b = jax.random.normal(kw1b, (hid2, in2), dtype=jnp.float32) * 0.1
    b1_b = jax.random.normal(kb1b, (hid2,), dtype=jnp.float32) * 0.1
    w2_b = jax.random.normal(kw2b, (in2, hid2), dtype=jnp.float32) * 0.1
    b2_b = jax.random.normal(kb2b, (in2,), dtype=jnp.float32) * 0.1

    ref_b = _reference(x_b, w1_b, b1_b, w2_b, b2_b)
    params_b = prepare_ffn_params(w1_b, b1_b, w2_b, b2_b,
                                  compute_dtype=None, max_hidden_tile=128)
    out_b = jax.block_until_ready(position_wise_feed_forward(x_b, params_b, tm=64))
    np.testing.assert_allclose(np.asarray(out_b), np.asarray(ref_b), rtol=5e-4, atol=5e-4)

    print("KERNEL_OK")
</pallas_src>

<mosaic_0001>
module attributes {stable_mosaic.version = 11 : i64} {
  func.func @ffn_kernel(%arg0: i32, %arg1: i32, %arg2: memref<8x16xf32, #tpu.memory_space<vmem>>, %arg3: memref<16x32xf32, #tpu.memory_space<vmem>>, %arg4: memref<1x32xf32, #tpu.memory_space<vmem>>, %arg5: memref<32x16xf32, #tpu.memory_space<vmem>>, %arg6: memref<1x16xf32, #tpu.memory_space<vmem>>, %arg7: memref<8x16xf32, #tpu.memory_space<vmem>>, %arg8: memref<8x16xf32, #tpu.memory_space<vmem>>) attributes {dimension_semantics = [#tpu.dimension_semantics<parallel>, #tpu.dimension_semantics<arbitrary>], iteration_bounds = array<i64: 2, 1>, scalar_prefetch = 0 : i64, scratch_operands = 1 : i64, tpu.core_type = #tpu.core_type<tc>, window_params = [{transform_indices = @transform_0, window_bounds = array<i64: 8, 16>}, {pipeline_mode = #tpu.pipeline_mode<synchronous>, transform_indices = @transform_1, window_bounds = array<i64: 16, 32>}, {pipeline_mode = #tpu.pipeline_mode<synchronous>, transform_indices = @transform_2, window_bounds = array<i64: 1, 32>}, {pipeline_mode = #tpu.pipeline_mode<synchronous>, transform_indices = @transform_3, window_bounds = array<i64: 32, 16>}, {pipeline_mode = #tpu.pipeline_mode<synchronous>, transform_indices = @transform_4, window_bounds = array<i64: 1, 16>}, {transform_indices = @transform_5, window_bounds = array<i64: 8, 16>}]} {
    %c0_i32 = arith.constant 0 : i32
    %0 = arith.cmpi eq, %arg1, %c0_i32 : i32
    %1 = arith.extui %0 : i1 to i32
    %c0_i32_0 = arith.constant 0 : i32
    %2 = arith.cmpi ne, %1, %c0_i32_0 : i32
    scf.if %2 {
      %cst_16 = arith.constant 0.000000e+00 : f32
      %19 = vector.broadcast %cst_16 : f32 to vector<8x16xf32>
      %c0_17 = arith.constant 0 : index
      %c0_18 = arith.constant 0 : index
      %20 = vector.load %arg8[%c0_17, %c0_18] : memref<8x16xf32, #tpu.memory_space<vmem>>, vector<8x16xf32>
      tpu.vector_store %arg8[%c0_17, %c0_18], %19 {strides = array<i32>} : memref<8x16xf32, #tpu.memory_space<vmem>>, vector<8x16xf32>,
    } else {
    }
    %c0 = arith.constant 0 : index
    %c0_1 = arith.constant 0 : index
    %3 = vector.load %arg2[%c0, %c0_1] : memref<8x16xf32, #tpu.memory_space<vmem>>, vector<8x16xf32>
    %c0_2 = arith.constant 0 : index
    %c0_3 = arith.constant 0 : index
    %4 = vector.load %arg3[%c0_2, %c0_3] : memref<16x32xf32, #tpu.memory_space<vmem>>, vector<16x32xf32>
    %cst = arith.constant dense<0.000000e+00> : vector<8x32xf32>
    %5 = tpu.matmul %3, %4, %cst {dimension_numbers = #tpu.dot_dimension_numbers<[1], [0], [0], [1], [0, 0, 1, 1], [], []>} : vector<8x16xf32>, vector<16x32xf32>, vector<8x32xf32> -> vector<8x32xf32>
    %c0_4 = arith.constant 0 : index
    %c0_5 = arith.constant 0 : index
    %6 = vector.load %arg4[%c0_4, %c0_5] : memref<1x32xf32, #tpu.memory_space<vmem>>, vector<1x32xf32>
    %7 = vector.broadcast %6 : vector<1x32xf32> to vector<8x32xf32>
    %8 = arith.addf %5, %7 : vector<8x32xf32>
    %cst_6 = arith.constant 0.000000e+00 : f32
    %9 = vector.broadcast %cst_6 : f32 to vector<8x32xf32>
    %10 = arith.maximumf %8, %9 : vector<8x32xf32>
    %c0_7 = arith.constant 0 : index
    %c0_8 = arith.constant 0 : index
    %11 = vector.load %arg8[%c0_7, %c0_8] : memref<8x16xf32, #tpu.memory_space<vmem>>, vector<8x16xf32>
    %c0_9 = arith.constant 0 : index
    %c0_10 = arith.constant 0 : index
    %12 = vector.load %arg5[%c0_9, %c0_10] : memref<32x16xf32, #tpu.memory_space<vmem>>, vector<32x16xf32>
    %cst_11 = arith.constant dense<0.000000e+00> : vector<8x16xf32>
    %13 = tpu.matmul %10, %12, %cst_11 {dimension_numbers = #tpu.dot_dimension_numbers<[1], [0], [0], [1], [0, 0, 1, 1], [], []>} : vector<8x32xf32>, vector<32x16xf32>, vector<8x16xf32> -> vector<8x16xf32>
    %14 = arith.addf %11, %13 : vector<8x16xf32>
    %c0_12 = arith.constant 0 : index
    %c0_13 = arith.constant 0 : index
    %15 = vector.load %arg8[%c0_12, %c0_13] : memref<8x16xf32, #tpu.memory_space<vmem>>, vector<8x16xf32>
    tpu.vector_store %arg8[%c0_12, %c0_13], %14 {strides = array<i32>} : memref<8x16xf32, #tpu.memory_space<vmem>>, vector<8x16xf32>,
    %c0_i32_14 = arith.constant 0 : i32
    %16 = arith.cmpi eq, %arg1, %c0_i32_14 : i32
    %17 = arith.extui %16 : i1 to i32
    %c0_i32_15 = arith.constant 0 : i32
    %18 = arith.cmpi ne, %17, %c0_i32_15 : i32
    scf.if %18 {
      %c0_16 = arith.constant 0 : index
      %c0_17 = arith.constant 0 : index
      %19 = vector.load %arg8[%c0_16, %c0_17] : memref<8x16xf32, #tpu.memory_space<vmem>>, vector<8x16xf32>
      %c0_18 = arith.constant 0 : index
      %c0_19 = arith.constant 0 : index
      %20 = vector.load %arg6[%c0_18, %c0_19] : memref<1x16xf32, #tpu.memory_space<vmem>>, vector<1x16xf32>
      %21 = vector.broadcast %20 : vector<1x16xf32> to vector<8x16xf32>
      %22 = arith.addf %19, %21 : vector<8x16xf32>
      %c0_20 = arith.constant 0 : index
      %c0_21 = arith.constant 0 : index
      %23 = vector.load %arg7[%c0_20, %c0_21] : memref<8x16xf32, #tpu.memory_space<vmem>>, vector<8x16xf32>
      tpu.vector_store %arg7[%c0_20, %c0_21], %22 {strides = array<i32>} : memref<8x16xf32, #tpu.memory_space<vmem>>, vector<8x16xf32>,
    } else {
    }
    return
  }
  func.func @transform_0(%arg0: i32, %arg1: i32) -> (i32, i32) {
    %c0_i32 = arith.constant 0 : i32
    %c0_i32_0 = arith.constant 0 : i32
    return %arg0, %c0_i32 : i32, i32
  }
  func.func @transform_1(%arg0: i32, %arg1: i32) -> (i32, i32) {
    %c0_i32 = arith.constant 0 : i32
    %c0_i32_0 = arith.constant 0 : i32
    return %c0_i32, %arg1 : i32, i32
  }
  func.func @transform_2(%arg0: i32, %arg1: i32) -> (i32, i32) {
    %c0_i32 = arith.constant 0 : i32
    %c0_i32_0 = arith.constant 0 : i32
    return %c0_i32, %arg1 : i32, i32
  }
  func.func @transform_3(%arg0: i32, %arg1: i32) -> (i32, i32) {
    %c0_i32 = arith.constant 0 : i32
    %c0_i32_0 = arith.constant 0 : i32
    return %arg1, %c0_i32 : i32, i32
  }
  func.func @transform_4(%arg0: i32, %arg1: i32) -> (i32, i32) {
    %c0_i32 = arith.constant 0 : i32
    %c0_i32_0 = arith.constant 0 : i32
    %c0_i32_1 = arith.constant 0 : i32
    return %c0_i32, %c0_i32_0 : i32, i32
  }
  func.func @transform_5(%arg0: i32, %arg1: i32) -> (i32, i32) {
    %c0_i32 = arith.constant 0 : i32
    %c0_i32_0 = arith.constant 0 : i32
    return %arg0, %c0_i32 : i32, i32
  }
}

module attributes {stable_mosaic.version = 11 : i64} {
  func.func @ffn_kernel(%arg0: i32, %arg1: i32, %arg2: memref<8x16xf32, #tpu.memory_space<vmem>>, %arg3: memref<16x32xf32, #tpu.memory_space<vmem>>, %arg4: memref<1x32xf32, #tpu.memory_space<vmem>>, %arg5: memref<32x16xf32, #tpu.memory_space<vmem>>, %arg6: memref<1x16xf32, #tpu.memory_space<vmem>>, %arg7: memref<8x16xf32, #tpu.memory_space<vmem>>, %arg8: memref<8x16xf32, #tpu.memory_space<vmem>>) attributes {dimension_semantics = [#tpu.dimension_semantics<parallel>, #tpu.dimension_semantics<arbitrary>], iteration_bounds = array<i64: 2, 1>, scalar_prefetch = 0 : i64, scratch_operands = 1 : i64, tpu.core_type = #tpu.core_type<tc>, window_params = [{transform_indices = @transform_0, window_bounds = array<i64: 8, 16>}, {transform_indices = @transform_1, window_bounds = array<i64: 16, 32>}, {transform_indices = @transform_2, window_bounds = array<i64: 1, 32>}, {transform_indices = @transform_3, window_bounds = array<i64: 32, 16>}, {pipeline_mode = #tpu.pipeline_mode<synchronous>, transform_indices = @transform_4, window_bounds = array<i64: 1, 16>}, {transform_indices = @transform_5, window_bounds = array<i64: 8, 16>}]} {
    %c0_i32 = arith.constant 0 : i32
    %0 = arith.cmpi eq, %arg1, %c0_i32 : i32
    %1 = arith.extui %0 : i1 to i32
    %c0_i32_0 = arith.constant 0 : i32
    %2 = arith.cmpi ne, %1, %c0_i32_0 : i32
    scf.if %2 {
      %cst_16 = arith.constant 0.000000e+00 : f32
      %19 = vector.broadcast %cst_16 : f32 to vector<8x16xf32>
      %c0_17 = arith.constant 0 : index
      %c0_18 = arith.constant 0 : index
      %20 = vector.load %arg8[%c0_17, %c0_18] : memref<8x16xf32, #tpu.memory_space<vmem>>, vector<8x16xf32>
      tpu.vector_store %arg8[%c0_17, %c0_18], %19 {strides = array<i32>} : memref<8x16xf32, #tpu.memory_space<vmem>>, vector<8x16xf32>,
    } else {
    }
    %c0 = arith.constant 0 : index
    %c0_1 = arith.constant 0 : index
    %3 = vector.load %arg2[%c0, %c0_1] : memref<8x16xf32, #tpu.memory_space<vmem>>, vector<8x16xf32>
    %c0_2 = arith.constant 0 : index
    %c0_3 = arith.constant 0 : index
    %4 = vector.load %arg3[%c0_2, %c0_3] : memref<16x32xf32, #tpu.memory_space<vmem>>, vector<16x32xf32>
    %cst = arith.constant dense<0.000000e+00> : vector<8x32xf32>
    %5 = tpu.matmul %3, %4, %cst {dimension_numbers = #tpu.dot_dimension_numbers<[1], [0], [0], [1], [0, 0, 1, 1], [], []>} : vector<8x16xf32>, vector<16x32xf32>, vector<8x32xf32> -> vector<8x32xf32>
    %c0_4 = arith.constant 0 : index
    %c0_5 = arith.constant 0 : index
    %6 = vector.load %arg4[%c0_4, %c0_5] : memref<1x32xf32, #tpu.memory_space<vmem>>, vector<1x32xf32>
    %7 = vector.broadcast %6 : vector<1x32xf32> to vector<8x32xf32>
    %8 = arith.addf %5, %7 : vector<8x32xf32>
    %cst_6 = arith.constant 0.000000e+00 : f32
    %9 = vector.broadcast %cst_6 : f32 to vector<8x32xf32>
    %10 = arith.maximumf %8, %9 : vector<8x32xf32>
    %c0_7 = arith.constant 0 : index
    %c0_8 = arith.constant 0 : index
    %11 = vector.load %arg8[%c0_7, %c0_8] : memref<8x16xf32, #tpu.memory_space<vmem>>, vector<8x16xf32>
    %c0_9 = arith.constant 0 : index
    %c0_10 = arith.constant 0 : index
    %12 = vector.load %arg5[%c0_9, %c0_10] : memref<32x16xf32, #tpu.memory_space<vmem>>, vector<32x16xf32>
    %cst_11 = arith.constant dense<0.000000e+00> : vector<8x16xf32>
    %13 = tpu.matmul %10, %12, %cst_11 {dimension_numbers = #tpu.dot_dimension_numbers<[1], [0], [0], [1], [0, 0, 1, 1], [], []>} : vector<8x32xf32>, vector<32x16xf32>, vector<8x16xf32> -> vector<8x16xf32>
    %14 = arith.addf %11, %13 : vector<8x16xf32>
    %c0_12 = arith.constant 0 : index
    %c0_13 = arith.constant 0 : index
    %15 = vector.load %arg8[%c0_12, %c0_13] : memref<8x16xf32, #tpu.memory_space<vmem>>, vector<8x16xf32>
    tpu.vector_store %arg8[%c0_12, %c0_13], %14 {strides = array<i32>} : memref<8x16xf32, #tpu.memory_space<vmem>>, vector<8x16xf32>,
    %c0_i32_14 = arith.constant 0 : i32
    %16 = arith.cmpi eq, %arg1, %c0_i32_14 : i32
    %17 = arith.extui %16 : i1 to i32
    %c0_i32_15 = arith.constant 0 : i32
    %18 = arith.cmpi ne, %17, %c0_i32_15 : i32
    scf.if %18 {
      %c0_16 = arith.constant 0 : index
      %c0_17 = arith.constant 0 : index
      %19 = vector.load %arg8[%c0_16, %c0_17] : memref<8x16xf32, #tpu.memory_space<vmem>>, vector<8x16xf32>
      %c0_18 = arith.constant 0 : index
      %c0_19 = arith.constant 0 : index
      %20 = vector.load %arg6[%c0_18, %c0_19] : memref<1x16xf32, #tpu.memory_space<vmem>>, vector<1x16xf32>
      %21 = vector.broadcast %20 : vector<1x16xf32> to vector<8x16xf32>
      %22 = arith.addf %19, %21 : vector<8x16xf32>
      %c0_20 = arith.constant 0 : index
      %c0_21 = arith.constant 0 : index
      %23 = vector.load %arg7[%c0_20, %c0_21] : memref<8x16xf32, #tpu.memory_space<vmem>>, vector<8x16xf32>
      tpu.vector_store %arg7[%c0_20, %c0_21], %22 {strides = array<i32>} : memref<8x16xf32, #tpu.memory_space<vmem>>, vector<8x16xf32>,
    } else {
    }
    return
  }
  func.func @transform_0(%arg0: i32, %arg1: i32) -> (i32, i32) {
    %c0_i32 = arith.constant 0 : i32
    %c0_i32_0 = arith.constant 0 : i32
    return %arg0, %c0_i32 : i32, i32
  }
  func.func @transform_1(%arg0: i32, %arg1: i32) -> (i32, i32) {
    %c0_i32 = arith.constant 0 : i32
    %c0_i32_0 = arith.constant 0 : i32
    return %c0_i32, %arg1 : i32, i32
  }
  func.func @transform_2(%arg0: i32, %arg1: i32) -> (i32, i32) {
    %c0_i32 = arith.constant 0 : i32
    %c0_i32_0 = arith.constant 0 : i32
    return %c0_i32, %arg1 : i32, i32
  }
  func.func @transform_3(%arg0: i32, %arg1: i32) -> (i32, i32) {
    %c0_i32 = arith.constant 0 : i32
    %c0_i32_0 = arith.constant 0 : i32
    return %arg1, %c0_i32 : i32, i32
  }
  func.func @transform_4(%arg0: i32, %arg1: i32) -> (i32, i32) {
    %c0_i32 = arith.constant 0 : i32
    %c0_i32_0 = arith.constant 0 : i32
    %c0_i32_1 = arith.constant 0 : i32
    return %c0_i32, %c0_i32_0 : i32, i32
  }
  func.func @transform_5(%arg0: i32, %arg1: i32) -> (i32, i32) {
    %c0_i32 = arith.constant 0 : i32
    %c0_i32_0 = arith.constant 0 : i32
    return %arg0, %c0_i32 : i32, i32
  }
}

</mosaic_0001>

<llo_original>
// kernel: tpu_custom_call.1
$region0: #{tpu_custom_call.1}
  #allocation0 [shape = 'u32[]', space=smem, size = 0x4, offset = 0x4, fixed_abs, tag = 'smem constant byte address 0x4 - core index']
  #allocation1 [shape = 'u32[72,128]{1,0:T(1,128)}', space=vmem, size = 0x9000, scoped, tag = 'internal scratch']
  #allocation2 [shape = 'f32[8,16]{1,0:T(8,128)}', space=vmem, size = 0x1000, scoped, tag = 'scratch operand']
  %s0 = inlined_call_operand.vmem [shape: f32[16,16], index: 0, kind: input, shape index: {}]
  %s1 = inlined_call_operand.vmem [shape: f32[16,32], index: 1, kind: input, shape index: {}]
  %s2 = inlined_call_operand.vmem [shape: f32[1,32], index: 2, kind: input, shape index: {}]
  %s3 = inlined_call_operand.vmem [shape: f32[32,16], index: 3, kind: input, shape index: {}]
  %s4 = inlined_call_operand.vmem [shape: f32[1,16], index: 4, kind: input, shape index: {}]
  %s5 = inlined_call_operand.hbm [shape: f32[16,16], index: 5, kind: output, shape index: {}]
  %s6 = sld [smem:[#allocation0]]
  $region61: #{tpu_custom_call.1} parent=0
    _
  %s8 = ssub.s32 1, %s6
  %s9 = scalar_select 0, %s8, %s6
  $region1: #{tpu_custom_call.1} parent=0
    #allocation3 [shape = 'u8[8192]{0}', space=vmem, size = 0x2000, scoped, tag = 'output window, operand 0']
    #allocation4 [shape = 's32[2]{0}', space=sflag, size = 0x8, scoped, tag = 'scoped memory for tpu_custom_call.1']
    %10 = vsyncpa [#allocation4], 0
    %s11 = scalar_lea.sflag [#allocation4], 1
    %12 = vsyncpa %s11, 0
    loop: start=0, step=1, limit=4
    $region2: #{tpu_custom_call.1} parent=1 // loop_pre_header
      _
    $region3: #{tpu_custom_call.1} parent=1 // loop_header
      %s14 = sphi 0, %s18
      %p15 = scmp.ge.s32.totalorder %s14, 4
      %s21 = sphi 0, %s33
      %s22 = sphi 0, %s29
      %s23 = sphi 0, %s21
      %s24 = sphi 0, %s22
      %s25 = sphi 0, %s23
      %s26 = sphi 0, %s24
      %s36 = sphi 0, %s38
      %s39 = sphi 0, %s36
      %s40 = sphi 0, %s39
      %s56 = sphi 0, %s40
      %s62 = sphi 0, %s64
      %s65 = sphi 0, %s62
      %s66 = sphi 0, %s65
      %s82 = sphi 0, %s66
      %s88 = sphi 0, %s90
      %s91 = sphi 0, %s88
      %s92 = sphi 0, %s91
      %s108 = sphi 0, %s92
      %s114 = sphi 0, %s116
      %s117 = sphi 0, %s114
      %s118 = sphi 0, %s117
      %s134 = sphi 0, %s118
      %s138 = sphi 0, %s138
      %s140 = sphi 0, %s138
      %s141 = sphi 0, %s140
      %s155 = sphi 0, %s141
      %s161 = sphi 0, %s163
      %s164 = sphi 0, %s161
      %s165 = sphi 0, %s164
      %s181 = sphi 0, %s165
    $region4: #{tpu_custom_call.1} parent=1 // loop_header_branch
      %17 = sbr.rel (%p15) target = $region8
    $region5: #{tpu_custom_call.1} parent=1 // loop_body
      %s19 = ssub.s32 %s14, 1
      %s20 = ssub.s32 %s14, 2
      %s27 = sadd.s32 1, %s22
      %p28 = scmp.ge.s32.totalorder %s27, 1
      %s29 = scalar_select %p28, 0, %s27
      %s30 = sadd.s32 1, %s21
      %s31 = scalar_select %p28, %s30, %s21
      %p32 = scmp.ge.s32.totalorder %s31, 2
      %s33 = scalar_select %p32, 0, %s31
      %s34 = ssub.s32 %s21, %s33
      %p35 = scmp.eq.s32.totalorder %s34, 0
      %s37 = sadd.s32 %s36, 1
      %s38 = scalar_select %p35, %s36, %s37
      %p41 = pneg %p35
      %p42 = scmp.eq.s32.totalorder %s14, 1
      %p43 = por %p41, %p42
      %p44 = scmp.ne.s32.totalorder %s36, %s39
      %p45 = scmp.eq.s32.totalorder %s14, 0
      %p46 = por %p44, %p45
      %p47 = scmp.ne.s32.totalorder %s36, %s39
      %p48 = scmp.eq.s32.totalorder %s19, 1
      %p49 = por %p47, %p48
      %p50 = scmp.ne.s32.totalorder %s39, %s40
      %p51 = scmp.eq.s32.totalorder %s19, 0
      %p52 = por %p50, %p51
      %p53 = scmp.ne.s32.totalorder %s39, %s40
      %p54 = scmp.eq.s32.totalorder %s20, 1
      %p55 = por %p53, %p54
      %p57 = scmp.ne.s32.totalorder %s40, %s56
      %p58 = scmp.eq.s32.totalorder %s20, 0
      %p59 = por %p57, %p58
      %s60 = ssub.s32 %s22, %s29
      %p61 = scmp.eq.s32.totalorder %s60, 0
      %s63 = sadd.s32 %s62, 1
      %s64 = scalar_select %p61, %s62, %s63
      %p67 = pneg %p61
      %p68 = scmp.eq.s32.totalorder %s14, 1
      %p69 = por %p67, %p68
      %p70 = scmp.ne.s32.totalorder %s62, %s65
      %p71 = scmp.eq.s32.totalorder %s14, 0
      %p72 = por %p70, %p71
      %p73 = scmp.ne.s32.totalorder %s62, %s65
      %p74 = scmp.eq.s32.totalorder %s19, 1
      %p75 = por %p73, %p74
      %p76 = scmp.ne.s32.totalorder %s65, %s66
      %p77 = scmp.eq.s32.totalorder %s19, 0
      %p78 = por %p76, %p77
      %p79 = scmp.ne.s32.totalorder %s65, %s66
      %p80 = scmp.eq.s32.totalorder %s20, 1
      %p81 = por %p79, %p80
      %p83 = scmp.ne.s32.totalorder %s66, %s82
      %p84 = scmp.eq.s32.totalorder %s20, 0
      %p85 = por %p83, %p84
      %s86 = ssub.s32 %s22, %s29
      %p87 = scmp.eq.s32.totalorder %s86, 0
      %s89 = sadd.s32 %s88, 1
      %s90 = scalar_select %p87, %s88, %s89
      %p93 = pneg %p87
      %p94 = scmp.eq.s32.totalorder %s14, 1
      %p95 = por %p93, %p94
      %p96 = scmp.ne.s32.totalorder %s88, %s91
      %p97 = scmp.eq.s32.totalorder %s14, 0
      %p98 = por %p96, %p97
      %p99 = scmp.ne.s32.totalorder %s88, %s91
      %p100 = scmp.eq.s32.totalorder %s19, 1
      %p101 = por %p99, %p100
      %p102 = scmp.ne.s32.totalorder %s91, %s92
      %p103 = scmp.eq.s32.totalorder %s19, 0
      %p104 = por %p102, %p103
      %p105 = scmp.ne.s32.totalorder %s91, %s92
      %p106 = scmp.eq.s32.totalorder %s20, 1
      %p107 = por %p105, %p106
      %p109 = scmp.ne.s32.totalorder %s92, %s108
      %p110 = scmp.eq.s32.totalorder %s20, 0
      %p111 = por %p109, %p110
      %s112 = ssub.s32 %s22, %s29
      %p113 = scmp.eq.s32.totalorder %s112, 0
      %s115 = sadd.s32 %s114, 1
      %s116 = scalar_select %p113, %s114, %s115
      %p119 = pneg %p113
      %p120 = scmp.eq.s32.totalorder %s14, 1
      %p121 = por %p119, %p120
      %p122 = scmp.ne.s32.totalorder %s114, %s117
      %p123 = scmp.eq.s32.totalorder %s14, 0
      %p124 = por %p122, %p123
      %p125 = scmp.ne.s32.totalorder %s114, %s117
      %p126 = scmp.eq.s32.totalorder %s19, 1
      %p127 = por %p125, %p126
      %p128 = scmp.ne.s32.totalorder %s117, %s118
      %p129 = scmp.eq.s32.totalorder %s19, 0
      %p130 = por %p128, %p129
      %p131 = scmp.ne.s32.totalorder %s117, %s118
      %p132 = scmp.eq.s32.totalorder %s20, 1
      %p133 = por %p131, %p132
      %p135 = scmp.ne.s32.totalorder %s118, %s134
      %p136 = scmp.eq.s32.totalorder %s20, 0
      %p137 = por %p135, %p136
      %s139 = sadd.s32 %s138, 1
      %p142 = scmp.eq.s32.totalorder %s14, 1
      %p143 = scmp.ne.s32.totalorder %s138, %s140
      %p144 = scmp.eq.s32.totalorder %s14, 0
      %p145 = por %p143, %p144
      %p146 = scmp.ne.s32.totalorder %s138, %s140
      %p147 = scmp.eq.s32.totalorder %s19, 1
      %p148 = por %p146, %p147
      %p149 = scmp.ne.s32.totalorder %s140, %s141
      %p150 = scmp.eq.s32.totalorder %s19, 0
      %p151 = por %p149, %p150
      %p152 = scmp.ne.s32.totalorder %s140, %s141
      %p153 = scmp.eq.s32.totalorder %s20, 1
      %p154 = por %p152, %p153
      %p156 = scmp.ne.s32.totalorder %s141, %s155
      %p157 = scmp.eq.s32.totalorder %s20, 0
      %p158 = por %p156, %p157
      %s159 = ssub.s32 %s21, %s33
      %p160 = scmp.eq.s32.totalorder %s159, 0
      %s162 = sadd.s32 %s161, 1
      %s163 = scalar_select %p160, %s161, %s162
      %p166 = pneg %p160
      %p167 = scmp.eq.s32.totalorder %s14, 1
      %p168 = por %p166, %p167
      %p169 = scmp.ne.s32.totalorder %s161, %s164
      %p170 = scmp.eq.s32.totalorder %s14, 0
      %p171 = por %p169, %p170
      %p172 = scmp.ne.s32.totalorder %s161, %s164
      %p173 = scmp.eq.s32.totalorder %s19, 1
      %p174 = por %p172, %p173
      %p175 = scmp.ne.s32.totalorder %s164, %s165
      %p176 = scmp.eq.s32.totalorder %s19, 0
      %p177 = por %p175, %p176
      %p178 = scmp.ne.s32.totalorder %s164, %s165
      %p179 = scmp.eq.s32.totalorder %s20, 1
      %p180 = por %p178, %p179
      %p182 = scmp.ne.s32.totalorder %s165, %s181
      %p183 = scmp.eq.s32.totalorder %s20, 0
      %p184 = por %p182, %p183
      %p185 = scmp.le.s32.totalorder 1, %s14
      %p186 = scmp.lt.s32.totalorder %s14, 3
      %p187 = pnand %p185, %p186
      %p188 = pneg %p187
      // Predicated region
      $region9: #{tpu_custom_call.1} parent=5 // pred_check
        _
      $region10: #{tpu_custom_call.1} parent=5 // pred_check_branch
        %190 = sbr.rel (%p187) target = $region12
      $region11: #{tpu_custom_call.1} parent=5 // pred_region
        %s191 = ssub.s32 %s14, 1
        // Predicated region
        $region13: #{tpu_custom_call.1} parent=11 // pred_check
          %p192 = pneg %p78
        $region14: #{tpu_custom_call.1} parent=11 // pred_check_branch
          %194 = sbr.rel (%p192) target = $region16
        $region15: #{tpu_custom_call.1} parent=11 // pred_region
          %p195 = scmp.lt.s32.totalorder %s24, 0
          %s196 = scalar_select %p195, %s24, 0
          %s197 = smul.addr %s196, 8
          %s198 = scalar_lea.vmem %s1, %s197
        $region16: #{tpu_custom_call.1} parent=11 // pred_fallthru
          _
        // Predicated region
        $region17: #{tpu_custom_call.1} parent=11 // pred_check
          %p199 = pneg %p104
        $region18: #{tpu_custom_call.1} parent=11 // pred_check_branch
          %201 = sbr.rel (%p199) target = $region20
        $region19: #{tpu_custom_call.1} parent=11 // pred_region
          %p202 = scmp.lt.s32.totalorder %s24, 0
          %s203 = scalar_select %p202, %s24, 0
          %s204 = scalar_lea.vmem %s2, %s203
        $region20: #{tpu_custom_call.1} parent=11 // pred_fallthru
          _
        // Predicated region
        $region21: #{tpu_custom_call.1} parent=11 // pred_check
          %p205 = pneg %p130
        $region22: #{tpu_custom_call.1} parent=11 // pred_check_branch
          %207 = sbr.rel (%p205) target = $region24
        $region23: #{tpu_custom_call.1} parent=11 // pred_region
          %s208 = smul.u32 4, %s24
          %p209 = scmp.lt.s32.totalorder %s208, 3
          %s210 = scalar_select %p209, %s208, 3
          %s211 = smul.addr %s210, 8
          %s212 = scalar_lea.vmem %s3, %s211
          %s213 = smul.u32 4, %s24
        $region24: #{tpu_custom_call.1} parent=11 // pred_fallthru
          _
        // Predicated region
        $region25: #{tpu_custom_call.1} parent=11 // pred_check
          %p214 = pneg %p151
        $region26: #{tpu_custom_call.1} parent=11 // pred_check_branch
          %216 = sbr.rel (%p214) target = $region28
        $region27: #{tpu_custom_call.1} parent=11 // pred_region
          _
        $region28: #{tpu_custom_call.1} parent=11 // pred_fallthru
          _
      $region12: #{tpu_custom_call.1} parent=5 // pred_fallthru
        _
      %p217 = scmp.lt.s32.totalorder %s14, 2
      // Predicated region
      $region29: #{tpu_custom_call.1} parent=5 // pred_check
        %p218 = pneg %p217
      $region30: #{tpu_custom_call.1} parent=5 // pred_check_branch
        %220 = sbr.rel (%p218) target = $region32
      $region31: #{tpu_custom_call.1} parent=5 // pred_region
        // Predicated region
        $region33: #{tpu_custom_call.1} parent=31 // pred_check
          %p221 = pneg %p46
        $region34: #{tpu_custom_call.1} parent=31 // pred_check_branch
          %223 = sbr.rel (%p221) target = $region36
        $region35: #{tpu_custom_call.1} parent=31 // pred_region
          %p224 = scmp.lt.s32.totalorder %s21, 1
          %s225 = scalar_select %p224, %s21, 1
          %s226 = smul.addr %s225, 8
          %s227 = scalar_lea.vmem %s0, %s226
        $region36: #{tpu_custom_call.1} parent=31 // pred_fallthru
          _
      $region32: #{tpu_custom_call.1} parent=5 // pred_fallthru
        _
      %p228 = scmp.le.s32.totalorder 1, %s14
      %p229 = scmp.lt.s32.totalorder %s14, 3
      %p230 = pnand %p228, %p229
      %p231 = pneg %p230
      // Predicated region
      $region37: #{tpu_custom_call.1} parent=5 // pred_check
        _
      $region38: #{tpu_custom_call.1} parent=5 // pred_check_branch
        %233 = sbr.rel (%p230) target = $region40
      $region39: #{tpu_custom_call.1} parent=5 // pred_region
        %s234 = ssub.s32 %s14, 1
        %p235 = scmp.lt.s32.totalorder %s23, 1
        %s236 = scalar_select %p235, %s23, 1
        %s237 = smul.addr %s236, 8
        %s238 = scalar_lea.vmem %s0, %s237
        %p239 = pneg %p52
        %p240 = pneg %p49
        %p241 = scmp.lt.s32.totalorder %s24, 0
        %s242 = scalar_select %p241, %s24, 0
        %s243 = smul.addr %s242, 8
        %s244 = scalar_lea.vmem %s1, %s243
        %p245 = pneg %p78
        %p246 = pneg %p75
        %p247 = scmp.lt.s32.totalorder %s24, 0
        %s248 = scalar_select %p247, %s24, 0
        %s249 = scalar_lea.vmem %s2, %s248
        %p250 = pneg %p104
        %p251 = pneg %p101
        %s252 = smul.u32 4, %s24
        %p253 = scmp.lt.s32.totalorder %s252, 3
        %s254 = scalar_select %p253, %s252, 3
        %s255 = smul.addr %s254, 8
        %s256 = scalar_lea.vmem %s3, %s255
        %p257 = pneg %p130
        %p258 = pneg %p127
        %p259 = pneg %p151
        %p260 = pneg %p148
        %p261 = pneg %p177
        %p262 = pneg %p174
        %s263 = sand.u32 %s164, 1
        %s264 = scalar_lea.sflag [#allocation4], %s263
        %s265 = sand.u32 %s164, 1
        %s266 = smul.addr %s265, 8
        %s267 = scalar_lea.vmem [#allocation3], %s266
        %p268 = scmp.lt.s32.totalorder %s23, 1
        %s269 = scalar_select %p268, %s23, 1
        %s270 = smul.addr %s269, 8
        %s271 = scalar_lea.vmem %s0, %s270
        %p272 = scmp.lt.s32.totalorder %s24, 0
        %s273 = scalar_select %p272, %s24, 0
        %s274 = smul.addr %s273, 8
        %s275 = scalar_lea.vmem %s1, %s274
        %p276 = scmp.lt.s32.totalorder %s24, 0
        %s277 = scalar_select %p276, %s24, 0
        %s278 = scalar_lea.vmem %s2, %s277
        %s279 = smul.u32 4, %s24
        %p280 = scmp.lt.s32.totalorder %s279, 3
        %s281 = scalar_select %p280, %s279, 3
        %s282 = smul.addr %s281, 8
        %s283 = scalar_lea.vmem %s3, %s282
        %s284 = smul.u32 4, %s24
        %p285 = scmp.eq.s32.totalorder %s24, 0
        // Predicated region
        $region41: #{tpu_custom_call.1} parent=39 // pred_check
          %p286 = pneg %p285
        $region42: #{tpu_custom_call.1} parent=39 // pred_check_branch
          %288 = sbr.rel (%p286) target = $region44
        $region43: #{tpu_custom_call.1} parent=39 // pred_region
          %vm289 = vcmask 130048
          %290 = vst.msk [vmem:[#allocation2] sm:$0xff] %vm289, 0.0
        $region44: #{tpu_custom_call.1} parent=39 // pred_fallthru
          _
        %v291 = vld [vmem:[%s271] sm:$0xff]
        %v292 = vld [vmem:[%s275] sm:$0xff]
        %v293 = vld [vmem:[%s275 + $0x8] sm:$0xff]
        %v294 = vld [vmem:[%s278] sm:$0x1]
        %v296 = vperm.slane %v294, 0
        %vm298 = vcmask 130048
        %v300 = vsel %vm298, %v291, 0
        %302 = vmatpush.msra.mxu0 0.0
        %303 = vmatpush.msra.mxu0 0.0
        %304 = vmatpush.msra.mxu0 0.0
        %305 = vmatpush.msra.mxu0 0.0
        %306 = vmatpush.msra.mxu0 0.0
        %307 = vmatpush.msra.mxu0 0.0
        %308 = vmatpush.msra.mxu0 0.0
        %309 = vmatpush.msra.mxu0 0.0
        %310 = vmatpush.msra.mxu0 0.0
        %311 = vmatpush.msra.mxu0 0.0
        %312 = vmatpush.msra.mxu0 0.0
        %313 = vmatpush.msra.mxu0 0.0
        %314 = vmatpush.msra.mxu0 0.0
        %315 = vmatpush.msra.mxu0 0.0
        %316 = vmatpush.msra.mxu0 %v293
        %317 = vmatpush.msra.mxu0 %v292
        %318 = vmatmul.f32.gmra.mxu0 %v300
        %v319 = vpop.f32.mrf.mxu0
        %v320 = vadd.f32 %v296, %v319
        %321 = vdwg.mxu0
        %v322 = vmax.f32 %v320, 0.0
        %v323 = vld [vmem:[#allocation2] sm:$0xff]
        %v324 = vld [vmem:[%s283] sm:$0xff]
        %v325 = vld [vmem:[%s283 + $0x8] sm:$0xff]
        %v326 = vld [vmem:[%s283 + $0x10] sm:$0xff]
        %v327 = vld [vmem:[%s283 + $0x18] sm:$0xff]
        %vm328 = vcmask 261120
        %v330 = vsel %vm328, %v322, 0
        %332 = vmatpush.msra.mxu0 0.0
        %333 = vmatpush.msra.mxu0 0.0
        %334 = vmatpush.msra.mxu0 0.0
        %335 = vmatpush.msra.mxu0 0.0
        %336 = vmatpush.msra.mxu0 0.0
        %337 = vmatpush.msra.mxu0 0.0
        %338 = vmatpush.msra.mxu0 0.0
        %339 = vmatpush.msra.mxu0 0.0
        %340 = vmatpush.msra.mxu0 0.0
        %341 = vmatpush.msra.mxu0 0.0
        %342 = vmatpush.msra.mxu0 0.0
        %343 = vmatpush.msra.mxu0 0.0
        %344 = vmatpush.msra.mxu0 %v327
        %345 = vmatpush.msra.mxu0 %v326
        %346 = vmatpush.msra.mxu0 %v325
        %347 = vmatpush.msra.mxu0 %v324
        %348 = vmatmul.f32.gmra.mxu0 %v330
        %v349 = vpop.f32.mrf.mxu0
        %v350 = vadd.f32 0.0, %v349
        %351 = vdwg.mxu0
        %v352 = vadd.f32 %v323, %v350
        %353 = vst.msk [vmem:[#allocation2] sm:$0xff] %vm298, %v352
        // Predicated region
        $region45: #{tpu_custom_call.1} parent=39 // pred_check
          %p354 = pneg %p285
        $region46: #{tpu_custom_call.1} parent=39 // pred_check_branch
          %356 = sbr.rel (%p354) target = $region48
        $region47: #{tpu_custom_call.1} parent=39 // pred_region
          %v357 = vld [vmem:[#allocation2] sm:$0xff]
          %v358 = vld [vmem:[%s4] sm:$0x1]
          %v360 = vperm.slane %v358, 0
          %v362 = vadd.f32 %v357, %v360
          %363 = vst.msk [vmem:[%s267] sm:$0xff] %vm298, %v362
        $region48: #{tpu_custom_call.1} parent=39 // pred_fallthru
          _
        %s364 = sand.u32 %s164, 1
        %s365 = scalar_lea.sflag [#allocation4], %s364
        %s366 = sand.u32 %s164, 1
        %s367 = smul.addr %s366, 8
        %s368 = scalar_lea.vmem [#allocation3], %s367
        // Predicated region
        $region49: #{tpu_custom_call.1} parent=39 // pred_check
          %p369 = pneg %p174
        $region50: #{tpu_custom_call.1} parent=39 // pred_check_branch
          %371 = sbr.rel (%p369) target = $region52
        $region51: #{tpu_custom_call.1} parent=39 // pred_region
          %373 = vsyncadd %s365, 0
          %s374 = smul.addr %s23, 8
          %s375 = scalar_lea.hbm %s5, %s374
          %s377 = sshll.u32 %s368, 4
          %s378 = int_to_ptr.vmem [resolvable:$true] %s377
          %s379 = sshll.u32 %s375, 4
          %s380 = int_to_ptr.hbm [resolvable:$true] %s379
          %382 = dma.vmem_to_hbm [thread:$0]  %s378, 128, %s380, %s365
        $region52: #{tpu_custom_call.1} parent=39 // pred_fallthru
          _
      $region40: #{tpu_custom_call.1} parent=5 // pred_fallthru
        _
      %p383 = scmp.le.s32.totalorder 2, %s14
      // Predicated region
      $region53: #{tpu_custom_call.1} parent=5 // pred_check
        %p384 = pneg %p383
      $region54: #{tpu_custom_call.1} parent=5 // pred_check_branch
        %386 = sbr.rel (%p384) target = $region56
      $region55: #{tpu_custom_call.1} parent=5 // pred_region
        %s387 = ssub.s32 %s14, 2
        // Predicated region
        $region57: #{tpu_custom_call.1} parent=55 // pred_check
          %p388 = pneg %p180
        $region58: #{tpu_custom_call.1} parent=55 // pred_check_branch
          %390 = sbr.rel (%p388) target = $region60
        $region59: #{tpu_custom_call.1} parent=55 // pred_region
          %s391 = sand.u32 %s165, 1
          %s392 = scalar_lea.sflag [#allocation4], %s391
          %s393 = sand.u32 %s165, 1
          %s394 = smul.addr %s393, 8
          %s395 = scalar_lea.vmem [#allocation3], %s394
          %397 = dma.done %s392, 128
        $region60: #{tpu_custom_call.1} parent=55 // pred_fallthru
          _
      $region56: #{tpu_custom_call.1} parent=5 // pred_fallthru
        _
    $region6: #{tpu_custom_call.1} parent=1 // loop_footer
      %s18 = sadd.s32 1, %s14
    $region7: #{tpu_custom_call.1} parent=1 // loop_footer_branch
      %13 = sbr.rel target = $region3
    $region8: #{tpu_custom_call.1} parent=1 // loop_exit
      _
    %398 = vsyncpa [#allocation4], 1
    %s399 = scalar_lea.sflag [#allocation4], 1
    %400 = vsyncpa %s399, 1

// kernel: tpu_custom_call.1
$region0: #{tpu_custom_call.1}
  #allocation0 [shape = 'u32[]', space=smem, size = 0x4, offset = 0x4, fixed_abs, tag = 'smem constant byte address 0x4 - core index']
  #allocation1 [shape = 'u32[72,128]{1,0:T(1,128)}', space=vmem, size = 0x9000, scoped, tag = 'internal scratch']
  #allocation2 [shape = 'f32[8,16]{1,0:T(8,128)}', space=vmem, size = 0x1000, scoped, tag = 'scratch operand']
  %s0 = inlined_call_operand.vmem [shape: f32[16,16], index: 0, kind: input, shape index: {}]
  %s1 = inlined_call_operand.vmem [shape: f32[16,32], index: 1, kind: input, shape index: {}]
  %s2 = inlined_call_operand.vmem [shape: f32[1,32], index: 2, kind: input, shape index: {}]
  %s3 = inlined_call_operand.vmem [shape: f32[32,16], index: 3, kind: input, shape index: {}]
  %s4 = inlined_call_operand.vmem [shape: f32[1,16], index: 4, kind: input, shape index: {}]
  %s5 = inlined_call_operand.hbm [shape: f32[16,16], index: 5, kind: output, shape index: {}]
  %s6 = sld [smem:[#allocation0]]
  $region61: #{tpu_custom_call.1} parent=0
    _
  %s8 = ssub.s32 1, %s6
  %s9 = scalar_select 0, %s8, %s6
  $region1: #{tpu_custom_call.1} parent=0
    #allocation3 [shape = 'u8[8192]{0}', space=vmem, size = 0x2000, scoped, tag = 'output window, operand 0']
    #allocation4 [shape = 's32[2]{0}', space=sflag, size = 0x8, scoped, tag = 'scoped memory for tpu_custom_call.1']
    %10 = vsyncpa [#allocation4], 0
    %s11 = scalar_lea.sflag [#allocation4], 1
    %12 = vsyncpa %s11, 0
    loop: start=0, step=1, limit=4
    $region2: #{tpu_custom_call.1} parent=1 // loop_pre_header
      _
    $region3: #{tpu_custom_call.1} parent=1 // loop_header
      %s14 = sphi 0, %s18
      %p15 = scmp.ge.s32.totalorder %s14, 4
      %s21 = sphi 0, %s33
      %s22 = sphi 0, %s29
      %s23 = sphi 0, %s21
      %s24 = sphi 0, %s22
      %s25 = sphi 0, %s23
      %s26 = sphi 0, %s24
      %s36 = sphi 0, %s38
      %s39 = sphi 0, %s36
      %s40 = sphi 0, %s39
      %s56 = sphi 0, %s40
      %s62 = sphi 0, %s64
      %s65 = sphi 0, %s62
      %s66 = sphi 0, %s65
      %s82 = sphi 0, %s66
      %s88 = sphi 0, %s90
      %s91 = sphi 0, %s88
      %s92 = sphi 0, %s91
      %s108 = sphi 0, %s92
      %s114 = sphi 0, %s116
      %s117 = sphi 0, %s114
      %s118 = sphi 0, %s117
      %s134 = sphi 0, %s118
      %s138 = sphi 0, %s138
      %s140 = sphi 0, %s138
      %s141 = sphi 0, %s140
      %s155 = sphi 0, %s141
      %s161 = sphi 0, %s163
      %s164 = sphi 0, %s161
      %s165 = sphi 0, %s164
      %s181 = sphi 0, %s165
    $region4: #{tpu_custom_call.1} parent=1 // loop_header_branch
      %17 = sbr.rel (%p15) target = $region8
    $region5: #{tpu_custom_call.1} parent=1 // loop_body
      %s19 = ssub.s32 %s14, 1
      %s20 = ssub.s32 %s14, 2
      %s27 = sadd.s32 1, %s22
      %p28 = scmp.ge.s32.totalorder %s27, 1
      %s29 = scalar_select %p28, 0, %s27
      %s30 = sadd.s32 1, %s21
      %s31 = scalar_select %p28, %s30, %s21
      %p32 = scmp.ge.s32.totalorder %s31, 2
      %s33 = scalar_select %p32, 0, %s31
      %s34 = ssub.s32 %s21, %s33
      %p35 = scmp.eq.s32.totalorder %s34, 0
      %s37 = sadd.s32 %s36, 1
      %s38 = scalar_select %p35, %s36, %s37
      %p41 = pneg %p35
      %p42 = scmp.eq.s32.totalorder %s14, 1
      %p43 = por %p41, %p42
      %p44 = scmp.ne.s32.totalorder %s36, %s39
      %p45 = scmp.eq.s32.totalorder %s14, 0
      %p46 = por %p44, %p45
      %p47 = scmp.ne.s32.totalorder %s36, %s39
      %p48 = scmp.eq.s32.totalorder %s19, 1
      %p49 = por %p47, %p48
      %p50 = scmp.ne.s32.totalorder %s39, %s40
      %p51 = scmp.eq.s32.totalorder %s19, 0
      %p52 = por %p50, %p51
      %p53 = scmp.ne.s32.totalorder %s39, %s40
      %p54 = scmp.eq.s32.totalorder %s20, 1
      %p55 = por %p53, %p54
      %p57 = scmp.ne.s32.totalorder %s40, %s56
      %p58 = scmp.eq.s32.totalorder %s20, 0
      %p59 = por %p57, %p58
      %s60 = ssub.s32 %s22, %s29
      %p61 = scmp.eq.s32.totalorder %s60, 0
      %s63 = sadd.s32 %s62, 1
      %s64 = scalar_select %p61, %s62, %s63
      %p67 = pneg %p61
      %p68 = scmp.eq.s32.totalorder %s14, 1
      %p69 = por %p67, %p68
      %p70 = scmp.ne.s32.totalorder %s62, %s65
      %p71 = scmp.eq.s32.totalorder %s14, 0
      %p72 = por %p70, %p71
      %p73 = scmp.ne.s32.totalorder %s62, %s65
      %p74 = scmp.eq.s32.totalorder %s19, 1
      %p75 = por %p73, %p74
      %p76 = scmp.ne.s32.totalorder %s65, %s66
      %p77 = scmp.eq.s32.totalorder %s19, 0
      %p78 = por %p76, %p77
      %p79 = scmp.ne.s32.totalorder %s65, %s66
      %p80 = scmp.eq.s32.totalorder %s20, 1
      %p81 = por %p79, %p80
      %p83 = scmp.ne.s32.totalorder %s66, %s82
      %p84 = scmp.eq.s32.totalorder %s20, 0
      %p85 = por %p83, %p84
      %s86 = ssub.s32 %s22, %s29
      %p87 = scmp.eq.s32.totalorder %s86, 0
      %s89 = sadd.s32 %s88, 1
      %s90 = scalar_select %p87, %s88, %s89
      %p93 = pneg %p87
      %p94 = scmp.eq.s32.totalorder %s14, 1
      %p95 = por %p93, %p94
      %p96 = scmp.ne.s32.totalorder %s88, %s91
      %p97 = scmp.eq.s32.totalorder %s14, 0
      %p98 = por %p96, %p97
      %p99 = scmp.ne.s32.totalorder %s88, %s91
      %p100 = scmp.eq.s32.totalorder %s19, 1
      %p101 = por %p99, %p100
      %p102 = scmp.ne.s32.totalorder %s91, %s92
      %p103 = scmp.eq.s32.totalorder %s19, 0
      %p104 = por %p102, %p103
      %p105 = scmp.ne.s32.totalorder %s91, %s92
      %p106 = scmp.eq.s32.totalorder %s20, 1
      %p107 = por %p105, %p106
      %p109 = scmp.ne.s32.totalorder %s92, %s108
      %p110 = scmp.eq.s32.totalorder %s20, 0
      %p111 = por %p109, %p110
      %s112 = ssub.s32 %s22, %s29
      %p113 = scmp.eq.s32.totalorder %s112, 0
      %s115 = sadd.s32 %s114, 1
      %s116 = scalar_select %p113, %s114, %s115
      %p119 = pneg %p113
      %p120 = scmp.eq.s32.totalorder %s14, 1
      %p121 = por %p119, %p120
      %p122 = scmp.ne.s32.totalorder %s114, %s117
      %p123 = scmp.eq.s32.totalorder %s14, 0
      %p124 = por %p122, %p123
      %p125 = scmp.ne.s32.totalorder %s114, %s117
      %p126 = scmp.eq.s32.totalorder %s19, 1
      %p127 = por %p125, %p126
      %p128 = scmp.ne.s32.totalorder %s117, %s118
      %p129 = scmp.eq.s32.totalorder %s19, 0
      %p130 = por %p128, %p129
      %p131 = scmp.ne.s32.totalorder %s117, %s118
      %p132 = scmp.eq.s32.totalorder %s20, 1
      %p133 = por %p131, %p132
      %p135 = scmp.ne.s32.totalorder %s118, %s134
      %p136 = scmp.eq.s32.totalorder %s20, 0
      %p137 = por %p135, %p136
      %s139 = sadd.s32 %s138, 1
      %p142 = scmp.eq.s32.totalorder %s14, 1
      %p143 = scmp.ne.s32.totalorder %s138, %s140
      %p144 = scmp.eq.s32.totalorder %s14, 0
      %p145 = por %p143, %p144
      %p146 = scmp.ne.s32.totalorder %s138, %s140
      %p147 = scmp.eq.s32.totalorder %s19, 1
      %p148 = por %p146, %p147
      %p149 = scmp.ne.s32.totalorder %s140, %s141
      %p150 = scmp.eq.s32.totalorder %s19, 0
      %p151 = por %p149, %p150
      %p152 = scmp.ne.s32.totalorder %s140, %s141
      %p153 = scmp.eq.s32.totalorder %s20, 1
      %p154 = por %p152, %p153
      %p156 = scmp.ne.s32.totalorder %s141, %s155
      %p157 = scmp.eq.s32.totalorder %s20, 0
      %p158 = por %p156, %p157
      %s159 = ssub.s32 %s21, %s33
      %p160 = scmp.eq.s32.totalorder %s159, 0
      %s162 = sadd.s32 %s161, 1
      %s163 = scalar_select %p160, %s161, %s162
      %p166 = pneg %p160
      %p167 = scmp.eq.s32.totalorder %s14, 1
      %p168 = por %p166, %p167
      %p169 = scmp.ne.s32.totalorder %s161, %s164
      %p170 = scmp.eq.s32.totalorder %s14, 0
      %p171 = por %p169, %p170
      %p172 = scmp.ne.s32.totalorder %s161, %s164
      %p173 = scmp.eq.s32.totalorder %s19, 1
      %p174 = por %p172, %p173
      %p175 = scmp.ne.s32.totalorder %s164, %s165
      %p176 = scmp.eq.s32.totalorder %s19, 0
      %p177 = por %p175, %p176
      %p178 = scmp.ne.s32.totalorder %s164, %s165
      %p179 = scmp.eq.s32.totalorder %s20, 1
      %p180 = por %p178, %p179
      %p182 = scmp.ne.s32.totalorder %s165, %s181
      %p183 = scmp.eq.s32.totalorder %s20, 0
      %p184 = por %p182, %p183
      %p185 = scmp.le.s32.totalorder 1, %s14
      %p186 = scmp.lt.s32.totalorder %s14, 3
      %p187 = pnand %p185, %p186
      %p188 = pneg %p187
      // Predicated region
      $region9: #{tpu_custom_call.1} parent=5 // pred_check
        _
      $region10: #{tpu_custom_call.1} parent=5 // pred_check_branch
        %190 = sbr.rel (%p187) target = $region12
      $region11: #{tpu_custom_call.1} parent=5 // pred_region
        %s191 = ssub.s32 %s14, 1
        // Predicated region
        $region13: #{tpu_custom_call.1} parent=11 // pred_check
          %p192 = pneg %p78
        $region14: #{tpu_custom_call.1} parent=11 // pred_check_branch
          %194 = sbr.rel (%p192) target = $region16
        $region15: #{tpu_custom_call.1} parent=11 // pred_region
          %p195 = scmp.lt.s32.totalorder %s24, 0
          %s196 = scalar_select %p195, %s24, 0
          %s197 = smul.addr %s196, 8
          %s198 = scalar_lea.vmem %s1, %s197
        $region16: #{tpu_custom_call.1} parent=11 // pred_fallthru
          _
        // Predicated region
        $region17: #{tpu_custom_call.1} parent=11 // pred_check
          %p199 = pneg %p104
        $region18: #{tpu_custom_call.1} parent=11 // pred_check_branch
          %201 = sbr.rel (%p199) target = $region20
        $region19: #{tpu_custom_call.1} parent=11 // pred_region
          %p202 = scmp.lt.s32.totalorder %s24, 0
          %s203 = scalar_select %p202, %s24, 0
          %s204 = scalar_lea.vmem %s2, %s203
        $region20: #{tpu_custom_call.1} parent=11 // pred_fallthru
          _
        // Predicated region
        $region21: #{tpu_custom_call.1} parent=11 // pred_check
          %p205 = pneg %p130
        $region22: #{tpu_custom_call.1} parent=11 // pred_check_branch
          %207 = sbr.rel (%p205) target = $region24
        $region23: #{tpu_custom_call.1} parent=11 // pred_region
          %s208 = smul.u32 4, %s24
          %p209 = scmp.lt.s32.totalorder %s208, 3
          %s210 = scalar_select %p209, %s208, 3
          %s211 = smul.addr %s210, 8
          %s212 = scalar_lea.vmem %s3, %s211
          %s213 = smul.u32 4, %s24
        $region24: #{tpu_custom_call.1} parent=11 // pred_fallthru
          _
        // Predicated region
        $region25: #{tpu_custom_call.1} parent=11 // pred_check
          %p214 = pneg %p151
        $region26: #{tpu_custom_call.1} parent=11 // pred_check_branch
          %216 = sbr.rel (%p214) target = $region28
        $region27: #{tpu_custom_call.1} parent=11 // pred_region
          _
        $region28: #{tpu_custom_call.1} parent=11 // pred_fallthru
          _
      $region12: #{tpu_custom_call.1} parent=5 // pred_fallthru
        _
      %p217 = scmp.lt.s32.totalorder %s14, 2
      // Predicated region
      $region29: #{tpu_custom_call.1} parent=5 // pred_check
        %p218 = pneg %p217
      $region30: #{tpu_custom_call.1} parent=5 // pred_check_branch
        %220 = sbr.rel (%p218) target = $region32
      $region31: #{tpu_custom_call.1} parent=5 // pred_region
        // Predicated region
        $region33: #{tpu_custom_call.1} parent=31 // pred_check
          %p221 = pneg %p46
        $region34: #{tpu_custom_call.1} parent=31 // pred_check_branch
          %223 = sbr.rel (%p221) target = $region36
        $region35: #{tpu_custom_call.1} parent=31 // pred_region
          %p224 = scmp.lt.s32.totalorder %s21, 1
          %s225 = scalar_select %p224, %s21, 1
          %s226 = smul.addr %s225, 8
          %s227 = scalar_lea.vmem %s0, %s226
        $region36: #{tpu_custom_call.1} parent=31 // pred_fallthru
          _
      $region32: #{tpu_custom_call.1} parent=5 // pred_fallthru
        _
      %p228 = scmp.le.s32.totalorder 1, %s14
      %p229 = scmp.lt.s32.totalorder %s14, 3
      %p230 = pnand %p228, %p229
      %p231 = pneg %p230
      // Predicated region
      $region37: #{tpu_custom_call.1} parent=5 // pred_check
        _
      $region38: #{tpu_custom_call.1} parent=5 // pred_check_branch
        %233 = sbr.rel (%p230) target = $region40
      $region39: #{tpu_custom_call.1} parent=5 // pred_region
        %s234 = ssub.s32 %s14, 1
        %p235 = scmp.lt.s32.totalorder %s23, 1
        %s236 = scalar_select %p235, %s23, 1
        %s237 = smul.addr %s236, 8
        %s238 = scalar_lea.vmem %s0, %s237
        %p239 = pneg %p52
        %p240 = pneg %p49
        %p241 = scmp.lt.s32.totalorder %s24, 0
        %s242 = scalar_select %p241, %s24, 0
        %s243 = smul.addr %s242, 8
        %s244 = scalar_lea.vmem %s1, %s243
        %p245 = pneg %p78
        %p246 = pneg %p75
        %p247 = scmp.lt.s32.totalorder %s24, 0
        %s248 = scalar_select %p247, %s24, 0
        %s249 = scalar_lea.vmem %s2, %s248
        %p250 = pneg %p104
        %p251 = pneg %p101
        %s252 = smul.u32 4, %s24
        %p253 = scmp.lt.s32.totalorder %s252, 3
        %s254 = scalar_select %p253, %s252, 3
        %s255 = smul.addr %s254, 8
        %s256 = scalar_lea.vmem %s3, %s255
        %p257 = pneg %p130
        %p258 = pneg %p127
        %p259 = pneg %p151
        %p260 = pneg %p148
        %p261 = pneg %p177
        %p262 = pneg %p174
        %s263 = sand.u32 %s164, 1
        %s264 = scalar_lea.sflag [#allocation4], %s263
        %s265 = sand.u32 %s164, 1
        %s266 = smul.addr %s265, 8
        %s267 = scalar_lea.vmem [#allocation3], %s266
        %p268 = scmp.lt.s32.totalorder %s23, 1
        %s269 = scalar_select %p268, %s23, 1
        %s270 = smul.addr %s269, 8
        %s271 = scalar_lea.vmem %s0, %s270
        %p272 = scmp.lt.s32.totalorder %s24, 0
        %s273 = scalar_select %p272, %s24, 0
        %s274 = smul.addr %s273, 8
        %s275 = scalar_lea.vmem %s1, %s274
        %p276 = scmp.lt.s32.totalorder %s24, 0
        %s277 = scalar_select %p276, %s24, 0
        %s278 = scalar_lea.vmem %s2, %s277
        %s279 = smul.u32 4, %s24
        %p280 = scmp.lt.s32.totalorder %s279, 3
        %s281 = scalar_select %p280, %s279, 3
        %s282 = smul.addr %s281, 8
        %s283 = scalar_lea.vmem %s3, %s282
        %s284 = smul.u32 4, %s24
        %p285 = scmp.eq.s32.totalorder %s24, 0
        // Predicated region
        $region41: #{tpu_custom_call.1} parent=39 // pred_check
          %p286 = pneg %p285
        $region42: #{tpu_custom_call.1} parent=39 // pred_check_branch
          %288 = sbr.rel (%p286) target = $region44
        $region43: #{tpu_custom_call.1} parent=39 // pred_region
          %vm289 = vcmask 130048
          %290 = vst.msk [vmem:[#allocation2] sm:$0xff] %vm289, 0.0
        $region44: #{tpu_custom_call.1} parent=39 // pred_fallthru
          _
        %v291 = vld [vmem:[%s271] sm:$0xff]
        %v292 = vld [vmem:[%s275] sm:$0xff]
        %v293 = vld [vmem:[%s275 + $0x8] sm:$0xff]
        %v294 = vld [vmem:[%s278] sm:$0x1]
        %v296 = vperm.slane %v294, 0
        %vm298 = vcmask 130048
        %v300 = vsel %vm298, %v291, 0
        %302 = vmatpush.msra.mxu0 0.0
        %303 = vmatpush.msra.mxu0 0.0
        %304 = vmatpush.msra.mxu0 0.0
        %305 = vmatpush.msra.mxu0 0.0
        %306 = vmatpush.msra.mxu0 0.0
        %307 = vmatpush.msra.mxu0 0.0
        %308 = vmatpush.msra.mxu0 0.0
        %309 = vmatpush.msra.mxu0 0.0
        %310 = vmatpush.msra.mxu0 0.0
        %311 = vmatpush.msra.mxu0 0.0
        %312 = vmatpush.msra.mxu0 0.0
        %313 = vmatpush.msra.mxu0 0.0
        %314 = vmatpush.msra.mxu0 0.0
        %315 = vmatpush.msra.mxu0 0.0
        %316 = vmatpush.msra.mxu0 %v293
        %317 = vmatpush.msra.mxu0 %v292
        %318 = vmatmul.f32.gmra.mxu0 %v300
        %v319 = vpop.f32.mrf.mxu0
        %v320 = vadd.f32 %v296, %v319
        %321 = vdwg.mxu0
        %v322 = vmax.f32 %v320, 0.0
        %v323 = vld [vmem:[#allocation2] sm:$0xff]
        %v324 = vld [vmem:[%s283] sm:$0xff]
        %v325 = vld [vmem:[%s283 + $0x8] sm:$0xff]
        %v326 = vld [vmem:[%s283 + $0x10] sm:$0xff]
        %v327 = vld [vmem:[%s283 + $0x18] sm:$0xff]
        %vm328 = vcmask 261120
        %v330 = vsel %vm328, %v322, 0
        %332 = vmatpush.msra.mxu0 0.0
        %333 = vmatpush.msra.mxu0 0.0
        %334 = vmatpush.msra.mxu0 0.0
        %335 = vmatpush.msra.mxu0 0.0
        %336 = vmatpush.msra.mxu0 0.0
        %337 = vmatpush.msra.mxu0 0.0
        %338 = vmatpush.msra.mxu0 0.0
        %339 = vmatpush.msra.mxu0 0.0
        %340 = vmatpush.msra.mxu0 0.0
        %341 = vmatpush.msra.mxu0 0.0
        %342 = vmatpush.msra.mxu0 0.0
        %343 = vmatpush.msra.mxu0 0.0
        %344 = vmatpush.msra.mxu0 %v327
        %345 = vmatpush.msra.mxu0 %v326
        %346 = vmatpush.msra.mxu0 %v325
        %347 = vmatpush.msra.mxu0 %v324
        %348 = vmatmul.f32.gmra.mxu0 %v330
        %v349 = vpop.f32.mrf.mxu0
        %v350 = vadd.f32 0.0, %v349
        %351 = vdwg.mxu0
        %v352 = vadd.f32 %v323, %v350
        %353 = vst.msk [vmem:[#allocation2] sm:$0xff] %vm298, %v352
        // Predicated region
        $region45: #{tpu_custom_call.1} parent=39 // pred_check
          %p354 = pneg %p285
        $region46: #{tpu_custom_call.1} parent=39 // pred_check_branch
          %356 = sbr.rel (%p354) target = $region48
        $region47: #{tpu_custom_call.1} parent=39 // pred_region
          %v357 = vld [vmem:[#allocation2] sm:$0xff]
          %v358 = vld [vmem:[%s4] sm:$0x1]
          %v360 = vperm.slane %v358, 0
          %v362 = vadd.f32 %v357, %v360
          %363 = vst.msk [vmem:[%s267] sm:$0xff] %vm298, %v362
        $region48: #{tpu_custom_call.1} parent=39 // pred_fallthru
          _
        %s364 = sand.u32 %s164, 1
        %s365 = scalar_lea.sflag [#allocation4], %s364
        %s366 = sand.u32 %s164, 1
        %s367 = smul.addr %s366, 8
        %s368 = scalar_lea.vmem [#allocation3], %s367
        // Predicated region
        $region49: #{tpu_custom_call.1} parent=39 // pred_check
          %p369 = pneg %p174
        $region50: #{tpu_custom_call.1} parent=39 // pred_check_branch
          %371 = sbr.rel (%p369) target = $region52
        $region51: #{tpu_custom_call.1} parent=39 // pred_region
          %373 = vsyncadd %s365, 0
          %s374 = smul.addr %s23, 8
          %s375 = scalar_lea.hbm %s5, %s374
          %s377 = sshll.u32 %s368, 4
          %s378 = int_to_ptr.vmem [resolvable:$true] %s377
          %s379 = sshll.u32 %s375, 4
          %s380 = int_to_ptr.hbm [resolvable:$true] %s379
          %382 = dma.vmem_to_hbm [thread:$0]  %s378, 128, %s380, %s365
        $region52: #{tpu_custom_call.1} parent=39 // pred_fallthru
          _
      $region40: #{tpu_custom_call.1} parent=5 // pred_fallthru
        _
      %p383 = scmp.le.s32.totalorder 2, %s14
      // Predicated region
      $region53: #{tpu_custom_call.1} parent=5 // pred_check
        %p384 = pneg %p383
      $region54: #{tpu_custom_call.1} parent=5 // pred_check_branch
        %386 = sbr.rel (%p384) target = $region56
      $region55: #{tpu_custom_call.1} parent=5 // pred_region
        %s387 = ssub.s32 %s14, 2
        // Predicated region
        $region57: #{tpu_custom_call.1} parent=55 // pred_check
          %p388 = pneg %p180
        $region58: #{tpu_custom_call.1} parent=55 // pred_check_branch
          %390 = sbr.rel (%p388) target = $region60
        $region59: #{tpu_custom_call.1} parent=55 // pred_region
          %s391 = sand.u32 %s165, 1
          %s392 = scalar_lea.sflag [#allocation4], %s391
          %s393 = sand.u32 %s165, 1
          %s394 = smul.addr %s393, 8
          %s395 = scalar_lea.vmem [#allocation3], %s394
          %397 = dma.done %s392, 128
        $region60: #{tpu_custom_call.1} parent=55 // pred_fallthru
          _
      $region56: #{tpu_custom_call.1} parent=5 // pred_fallthru
        _
    $region6: #{tpu_custom_call.1} parent=1 // loop_footer
      %s18 = sadd.s32 1, %s14
    $region7: #{tpu_custom_call.1} parent=1 // loop_footer_branch
      %13 = sbr.rel target = $region3
    $region8: #{tpu_custom_call.1} parent=1 // loop_exit
      _
    %398 = vsyncpa [#allocation4], 1
    %s399 = scalar_lea.sflag [#allocation4], 1
    %400 = vsyncpa %s399, 1

</llo_original>
